<compile_context>
chip_gen: v6e
topology: v6e:2x2x1
jax: 0.10.0
libtpu: 0.0.40
codegen_flags: <defaults>
</compile_context>

<pallas_src>
import math
import numpy as np
import jax
import jax.numpy as jnp
from jax.experimental import pallas as pl
from jax.experimental.pallas import tpu as pltpu


def _make_kernel(grid_size, spline_order, grid_range, eps=1e-5):
    """Builds the BSRBF-KAN kernel body; only Python scalars are closed over."""
    lo, hi = float(grid_range[0]), float(grid_range[1])
    h = (hi - lo) / grid_size                    # uniform B-spline knot spacing
    so = int(spline_order)
    nb0 = grid_size + 2 * so                     # number of order-0 bases
    K = grid_size + so                           # bases per input feature
    denom = (hi - lo) / (K - 1)                  # RBF width / center spacing
    inv_denom = 1.0 / denom

    def kernel(x_ref, gamma_ref, beta_ref, offb_ref, offr_ref, w_ref,
               o_ref, feat_ref):
        # Build the fused bf16 feature block only on the first out-tile of
        # each row tile; later out tiles reuse it straight from VMEM.
        @pl.when(pl.program_id(1) == 0)
        def _build_features():
            x = x_ref[...]                       # (TR, D) f32
            D = x.shape[-1]

            # ---- LayerNorm over features (gamma folded into rsqrt scale) ----
            mu = jnp.mean(x, axis=-1, keepdims=True)
            var = jnp.mean(jnp.square(x - mu), axis=-1, keepdims=True)
            scale = gamma_ref[...] * jax.lax.rsqrt(var + eps)
            xn = (x - mu) * scale + beta_ref[...]

            # ---- base branch ----
            base = jnp.maximum(xn, 0.0)          # (TR, D)

            # ---- j-major shifted copies, built fully in vregs ----
            # tiled[:, j*D + d] = xn[:, d]
            tiled = jnp.concatenate([xn] * nb0, axis=-1)          # (TR, nb0*D)
            xs = tiled - offb_ref[...]                            # xn - g_j
            rb = tiled[:, :K * D] * inv_denom - offr_ref[...]     # (xn - c_j)/denom

            # ---- Cox-de-Boor recursion (uniform knots, 1/(k h) factored) ----
            bases = jnp.where((xs >= 0.0) & (xs < h), 1.0, 0.0)   # order 0
            for k in range(1, so + 1):
                Lk = (nb0 - k) * D
                t = xs[:, :Lk]
                inv = 1.0 / (k * h)
                bases = (t * bases[:, :Lk]
                         + ((k + 1) * h - t) * bases[:, D:]) * inv
            # bases: (TR, K*D), column j*D + d = basis j of feature d

            # ---- RBF bases (same layout), single wide exp ----
            rbf = jnp.exp(-jnp.square(rb))                        # (TR, K*D)
            bsrbf = bases + rbf

            # Fused feature block [base | bsrbf] in bf16 for the MXU.
            feat_ref[...] = jnp.concatenate(
                [base, bsrbf], axis=-1).astype(feat_ref.dtype)

        # ---- one fused MXU contraction: bf16 operands, f32 accumulation ----
        o_ref[...] = jnp.dot(feat_ref[...], w_ref[...],
                             preferred_element_type=jnp.float32)

    return kernel


def bsrbf_kan_forward(x, gamma, beta, base_weight, spline_weight, *,
                      grid_size=5, spline_order=3, grid_range=(-1.5, 1.5),
                      tile_rows=512, tile_out=256):
    """x: (B, S, D) float32.  Returns (B, S, output_dim)."""
    B, S, D = x.shape
    out_dim = base_weight.shape[0]
    so = int(spline_order)
    K = grid_size + so
    nb0 = grid_size + 2 * so
    D_tot = D + K * D
    lo, hi = float(grid_range[0]), float(grid_range[1])
    h = (hi - lo) / grid_size
    denom = (hi - lo) / (K - 1)
    N = B * S

    # Keep >= 2 row tiles when the problem is small so v7x's second TensorCore
    # has work on the "parallel" axis; large N keeps the big tile.
    if N < 2 * tile_rows:
        half = (N + 1) // 2
        tile_rows = max(8, ((half + 7) // 8) * 8)
    n_row_tiles = pl.cdiv(N, tile_rows)
    N_pad = n_row_tiles * tile_rows

    # Lane-dense output tiling (multiples of 128).
    out_pad128 = pl.cdiv(out_dim, 128) * 128
    tn = max(128, (min(tile_out, out_pad128) // 128) * 128)
    n_out_tiles = pl.cdiv(out_pad128, tn)
    out_pad = n_out_tiles * tn

    x2 = x.reshape(N, D).astype(jnp.float32)
    if N_pad != N:
        x2 = jnp.pad(x2, ((0, N_pad - N), (0, 0)))

    # Fused weight (bf16): rows [0:D] = base branch (ReLU), rows [D:] = spline
    # branch reordered from PyTorch's flat column d*K + j to j-major j*D + d.
    wb = base_weight.astype(jnp.float32).T                         # (D, out)
    ws = spline_weight.astype(jnp.float32).reshape(out_dim, D, K)
    ws = ws.transpose(2, 1, 0).reshape(K * D, out_dim)             # (K*D, out)
    w_all = jnp.concatenate([wb, ws], axis=0)                      # (D_tot, out)
    if out_pad != out_dim:
        w_all = jnp.pad(w_all, ((0, 0), (0, out_pad - out_dim)))
    w_all = w_all.astype(jnp.bfloat16)

    # Per-column offsets for the vectorized shifted-copy construction.
    # (runtime inputs to pallas_call, not captured constants)
    jb = np.arange(nb0, dtype=np.float64)
    offb = np.repeat(lo + (jb - so) * h, D).astype(np.float32).reshape(1, nb0 * D)
    jr = np.arange(K, dtype=np.float64)
    offr = np.repeat(lo / denom + jr, D).astype(np.float32).reshape(1, K * D)
    offb = jnp.asarray(offb)
    offr = jnp.asarray(offr)

    kernel = _make_kernel(grid_size, spline_order, grid_range)

    # Per-step VMEM footprint (double-buffered pipelined blocks + scratch).
    vmem_bytes = (
        2 * tile_rows * D * 4                    # x row tile
        + 2 * (2 * D + nb0 * D + K * D) * 4      # gamma/beta/offsets
        + 2 * D_tot * tn * 2                     # bf16 weight tile
        + 2 * tile_rows * tn * 4                 # output tile
        + tile_rows * D_tot * 2                  # bf16 feature scratch
    )
    vmem_limit = int(min(64 * 1024 * 1024, max(16 * 1024 * 1024, 2 * vmem_bytes)))

    cost = pl.CostEstimate(
        flops=int(2 * N_pad * D_tot * out_pad),
        transcendentals=int(N_pad * (K * D + 1)),
        bytes_accessed=int(4 * N_pad * (D + out_pad) + 2 * D_tot * out_pad
                           + 4 * (2 * D + nb0 * D + K * D)),
    )

    out = pl.pallas_call(
        kernel,
        out_shape=jax.ShapeDtypeStruct((N_pad, out_pad), jnp.float32),
        grid=(n_row_tiles, n_out_tiles),
        in_specs=[
            pl.BlockSpec((tile_rows, D), lambda i, j: (i, 0)),     # x row tile
            pl.BlockSpec((1, D), lambda i, j: (0, 0)),             # gamma
            pl.BlockSpec((1, D), lambda i, j: (0, 0)),             # beta
            pl.BlockSpec((1, nb0 * D), lambda i, j: (0, 0)),       # spline knots (j-major)
            pl.BlockSpec((1, K * D), lambda i, j: (0, 0)),         # RBF centers (scaled)
            pl.BlockSpec((D_tot, tn), lambda i, j: (0, j)),        # fused bf16 weight
        ],
        out_specs=pl.BlockSpec((tile_rows, tn), lambda i, j: (i, j)),
        scratch_shapes=[
            pltpu.VMEM((tile_rows, D_tot), jnp.bfloat16),          # fused features
        ],
        compiler_params=pltpu.CompilerParams(
            dimension_semantics=("parallel", "arbitrary"),
            vmem_limit_bytes=vmem_limit),
        cost_estimate=cost,
    )(x2, gamma.reshape(1, D).astype(jnp.float32),
      beta.reshape(1, D).astype(jnp.float32), offb, offr, w_all)

    return out[:N, :out_dim].reshape(B, S, out_dim)


def _reference(x, gamma, beta, base_w, spline_w, grid_size, spline_order,
               grid_range):
    """Pure-JAX reimplementation of the PyTorch forward for validation."""
    D = x.shape[-1]
    K = grid_size + spline_order
    mu = x.mean(-1, keepdims=True)
    var = ((x - mu) ** 2).mean(-1, keepdims=True)
    xn = (x - mu) / jnp.sqrt(var + 1e-5) * gamma + beta
    base = jnp.maximum(xn, 0.0) @ base_w.T
    h = (grid_range[1] - grid_range[0]) / grid_size
    g = jnp.arange(-spline_order, grid_size + spline_order + 1,
                   dtype=jnp.float32) * h + grid_range[0]
    grid = jnp.broadcast_to(g, (D, g.shape[0]))
    xe = xn[..., None]
    bases = ((xe >= grid[:, :-1]) & (xe < grid[:, 1:])).astype(xn.dtype)
    for k in range(1, spline_order + 1):
        bases = ((xe - grid[:, :-(k + 1)])
                 / (grid[:, k:-1] - grid[:, :-(k + 1)]) * bases[..., :-1]
                 + (grid[:, k + 1:] - xe)
                 / (grid[:, k + 1:] - grid[:, 1:-k]) * bases[..., 1:])
    rbf_g = jnp.linspace(grid_range[0], grid_range[1], K)
    denom = (grid_range[1] - grid_range[0]) / (K - 1)
    rbf = jnp.exp(-((xe - rbf_g) / denom) ** 2)
    bsrbf = (bases + rbf).reshape(x.shape[0], x.shape[1], -1)
    return base + bsrbf @ spline_w.T


if __name__ == "__main__":
    # Small shapes consistent with the module: x is (batch, seq, input_dim).
    B, S, input_dim, output_dim = 2, 8, 8, 16
    grid_size, spline_order = 5, 3
    grid_range = (-1.5, 1.5)
    K = grid_size + spline_order

    key = jax.random.PRNGKey(0)
    kx, kb, ks = jax.random.split(key, 3)

    x = jax.random.normal(kx, (B, S, input_dim), dtype=jnp.float32)

    # deterministic parameter init (kaiming_uniform-like bounds)
    bound_b = 1.0 / math.sqrt(input_dim)
    base_weight = jax.random.uniform(kb, (output_dim, input_dim),
                                     minval=-bound_b, maxval=bound_b,
                                     dtype=jnp.float32)
    bound_s = 1.0 / math.sqrt(input_dim * K)
    spline_weight = jax.random.uniform(ks, (output_dim, input_dim * K),
                                       minval=-bound_s, maxval=bound_s,
                                       dtype=jnp.float32)
    gamma = jnp.ones((input_dim,), jnp.float32)   # LayerNorm weight
    beta = jnp.zeros((input_dim,), jnp.float32)   # LayerNorm bias

    out = bsrbf_kan_forward(x, gamma, beta, base_weight, spline_weight,
                            grid_size=grid_size, spline_order=spline_order,
                            grid_range=grid_range)
    out = jax.block_until_ready(out)

    ref = _reference(x, gamma, beta, base_weight, spline_weight,
                     grid_size, spline_order, grid_range)
    # Tolerance covers the bf16 MXU operands (f32 accumulation) vs the f32 XLA dot.
    np.testing.assert_allclose(np.asarray(out), np.asarray(ref),
                               rtol=2e-2, atol=2e-2)
    print("KERNEL_OK")
</pallas_src>

<mosaic_0001>
module attributes {stable_mosaic.version = 11 : i64} {
  func.func @kernel(%arg0: i32, %arg1: i32, %arg2: memref<8x8xf32, #tpu.memory_space<vmem>>, %arg3: memref<1x8xf32, #tpu.memory_space<vmem>>, %arg4: memref<1x8xf32, #tpu.memory_space<vmem>>, %arg5: memref<1x88xf32, #tpu.memory_space<vmem>>, %arg6: memref<1x64xf32, #tpu.memory_space<vmem>>, %arg7: memref<72x128xbf16, #tpu.memory_space<vmem>>, %arg8: memref<8x128xf32, #tpu.memory_space<vmem>>, %arg9: memref<8x72xbf16, #tpu.memory_space<vmem>>) attributes {dimension_semantics = [#tpu.dimension_semantics<parallel>, #tpu.dimension_semantics<arbitrary>], iteration_bounds = array<i64: 2, 1>, scalar_prefetch = 0 : i64, scratch_operands = 1 : i64, tpu.core_type = #tpu.core_type<tc>, window_params = [{transform_indices = @transform_0, window_bounds = array<i64: 8, 8>}, {pipeline_mode = #tpu.pipeline_mode<synchronous>, transform_indices = @transform_1, window_bounds = array<i64: 1, 8>}, {pipeline_mode = #tpu.pipeline_mode<synchronous>, transform_indices = @transform_2, window_bounds = array<i64: 1, 8>}, {pipeline_mode = #tpu.pipeline_mode<synchronous>, transform_indices = @transform_3, window_bounds = array<i64: 1, 88>}, {pipeline_mode = #tpu.pipeline_mode<synchronous>, transform_indices = @transform_4, window_bounds = array<i64: 1, 64>}, {transform_indices = @transform_5, window_bounds = array<i64: 72, 128>}, {transform_indices = @transform_6, window_bounds = array<i64: 8, 128>}]} {
    %c0_i32 = arith.constant 0 : i32
    %0 = arith.cmpi eq, %arg1, %c0_i32 : i32
    %1 = arith.extui %0 : i1 to i32
    %c0_i32_0 = arith.constant 0 : i32
    %2 = arith.cmpi ne, %1, %c0_i32_0 : i32
    scf.if %2 {
      %c0_6 = arith.constant 0 : index
      %c0_7 = arith.constant 0 : index
      %7 = vector.load %arg2[%c0_6, %c0_7] : memref<8x8xf32, #tpu.memory_space<vmem>>, vector<8x8xf32>
      %cst_8 = arith.constant dense<0.000000e+00> : vector<8xf32>
      %8 = vector.multi_reduction <add>, %7, %cst_8 [1] : vector<8x8xf32> to vector<8xf32>
      %9 = vector.shape_cast %8 : vector<8xf32> to vector<8x1xf32>
      %cst_9 = arith.constant 8.000000e+00 : f32
      %10 = vector.broadcast %cst_9 : f32 to vector<8x1xf32>
      %11 = arith.divf %9, %10 : vector<8x1xf32>
      %12 = vector.broadcast %11 : vector<8x1xf32> to vector<8x8xf32>
      %13 = arith.subf %7, %12 : vector<8x8xf32>
      %14 = arith.mulf %13, %13 : vector<8x8xf32>
      %cst_10 = arith.constant dense<0.000000e+00> : vector<8xf32>
      %15 = vector.multi_reduction <add>, %14, %cst_10 [1] : vector<8x8xf32> to vector<8xf32>
      %16 = vector.shape_cast %15 : vector<8xf32> to vector<8x1xf32>
      %cst_11 = arith.constant 8.000000e+00 : f32
      %17 = vector.broadcast %cst_11 : f32 to vector<8x1xf32>
      %18 = arith.divf %16, %17 : vector<8x1xf32>
      %c0_12 = arith.constant 0 : index
      %c0_13 = arith.constant 0 : index
      %19 = vector.load %arg3[%c0_12, %c0_13] : memref<1x8xf32, #tpu.memory_space<vmem>>, vector<1x8xf32>
      %cst_14 = arith.constant 9.99999974E-6 : f32
      %20 = vector.broadcast %cst_14 : f32 to vector<8x1xf32>
      %21 = arith.addf %18, %20 : vector<8x1xf32>
      %22 = math.rsqrt %21 : vector<8x1xf32>
      %23 = vector.broadcast %19 : vector<1x8xf32> to vector<8x8xf32>
      %24 = vector.broadcast %22 : vector<8x1xf32> to vector<8x8xf32>
      %25 = arith.mulf %23, %24 : vector<8x8xf32>
      %26 = vector.broadcast %11 : vector<8x1xf32> to vector<8x8xf32>
      %27 = arith.subf %7, %26 : vector<8x8xf32>
      %28 = arith.mulf %27, %25 : vector<8x8xf32>
      %c0_15 = arith.constant 0 : index
      %c0_16 = arith.constant 0 : index
      %29 = vector.load %arg4[%c0_15, %c0_16] : memref<1x8xf32, #tpu.memory_space<vmem>>, vector<1x8xf32>
      %30 = vector.broadcast %29 : vector<1x8xf32> to vector<8x8xf32>
      %31 = arith.addf %28, %30 : vector<8x8xf32>
      %cst_17 = arith.constant 0.000000e+00 : f32
      %32 = vector.broadcast %cst_17 : f32 to vector<8x8xf32>
      %33 = arith.maximumf %31, %32 : vector<8x8xf32>
      %34 = tpu.concatenate %31, %31, %31, %31, %31, %31, %31, %31, %31, %31, %31 in 1 : vector<8x8xf32>, vector<8x8xf32>, vector<8x8xf32>, vector<8x8xf32>, vector<8x8xf32>, vector<8x8xf32>, vector<8x8xf32>, vector<8x8xf32>, vector<8x8xf32>, vector<8x8xf32>, vector<8x8xf32> -> vector<8x88xf32>
      %c0_18 = arith.constant 0 : index
      %c0_19 = arith.constant 0 : index
      %35 = vector.load %arg5[%c0_18, %c0_19] : memref<1x88xf32, #tpu.memory_space<vmem>>, vector<1x88xf32>
      %36 = vector.broadcast %35 : vector<1x88xf32> to vector<8x88xf32>
      %37 = arith.subf %34, %36 : vector<8x88xf32>
      %38 = vector.extract_strided_slice %34 {offsets = [0, 0], sizes = [8, 64], strides = [1, 1]} : vector<8x88xf32> to vector<8x64xf32>
      %cst_20 = arith.constant 2.33333325 : f32
      %39 = vector.broadcast %cst_20 : f32 to vector<8x64xf32>
      %40 = arith.mulf %38, %39 : vector<8x64xf32>
      %c0_21 = arith.constant 0 : index
      %c0_22 = arith.constant 0 : index
      %41 = vector.load %arg6[%c0_21, %c0_22] : memref<1x64xf32, #tpu.memory_space<vmem>>, vector<1x64xf32>
      %42 = vector.broadcast %41 : vector<1x64xf32> to vector<8x64xf32>
      %43 = arith.subf %40, %42 : vector<8x64xf32>
      %cst_23 = arith.constant 0.000000e+00 : f32
      %44 = vector.broadcast %cst_23 : f32 to vector<8x88xf32>
      %45 = arith.cmpf oge, %37, %44 : vector<8x88xf32>
      %cst_24 = arith.constant 6.000000e-01 : f32
      %46 = vector.broadcast %cst_24 : f32 to vector<8x88xf32>
      %47 = arith.cmpf olt, %37, %46 : vector<8x88xf32>
      %48 = arith.andi %45, %47 : vector<8x88xi1>
      %cst_25 = arith.constant 1.000000e+00 : f32
      %cst_26 = arith.constant 0.000000e+00 : f32
      %49 = vector.broadcast %cst_25 : f32 to vector<8x88xf32>
      %50 = vector.broadcast %cst_26 : f32 to vector<8x88xf32>
      %51 = arith.select %48, %49, %50 : vector<8x88xi1>, vector<8x88xf32>
      %52 = vector.extract_strided_slice %37 {offsets = [0, 0], sizes = [8, 80], strides = [1, 1]} : vector<8x88xf32> to vector<8x80xf32>
      %53 = vector.extract_strided_slice %51 {offsets = [0, 0], sizes = [8, 80], strides = [1, 1]} : vector<8x88xf32> to vector<8x80xf32>
      %54 = arith.mulf %52, %53 : vector<8x80xf32>
      %cst_27 = arith.constant 1.200000e+00 : f32
      %55 = vector.broadcast %cst_27 : f32 to vector<8x80xf32>
      %56 = arith.subf %55, %52 : vector<8x80xf32>
      %57 = vector.extract_strided_slice %51 {offsets = [0, 8], sizes = [8, 80], strides = [1, 1]} : vector<8x88xf32> to vector<8x80xf32>
      %58 = arith.mulf %56, %57 : vector<8x80xf32>
      %59 = arith.addf %54, %58 : vector<8x80xf32>
      %cst_28 = arith.constant 1.66666663 : f32
      %60 = vector.broadcast %cst_28 : f32 to vector<8x80xf32>
      %61 = arith.mulf %59, %60 : vector<8x80xf32>
      %62 = vector.extract_strided_slice %37 {offsets = [0, 0], sizes = [8, 72], strides = [1, 1]} : vector<8x88xf32> to vector<8x72xf32>
      %63 = vector.extract_strided_slice %61 {offsets = [0, 0], sizes = [8, 72], strides = [1, 1]} : vector<8x80xf32> to vector<8x72xf32>
      %64 = arith.mulf %62, %63 : vector<8x72xf32>
      %cst_29 = arith.constant 1.800000e+00 : f32
      %65 = vector.broadcast %cst_29 : f32 to vector<8x72xf32>
      %66 = arith.subf %65, %62 : vector<8x72xf32>
      %67 = vector.extract_strided_slice %61 {offsets = [0, 8], sizes = [8, 72], strides = [1, 1]} : vector<8x80xf32> to vector<8x72xf32>
      %68 = arith.mulf %66, %67 : vector<8x72xf32>
      %69 = arith.addf %64, %68 : vector<8x72xf32>
      %cst_30 = arith.constant 0.833333313 : f32
      %70 = vector.broadcast %cst_30 : f32 to vector<8x72xf32>
      %71 = arith.mulf %69, %70 : vector<8x72xf32>
      %72 = vector.extract_strided_slice %37 {offsets = [0, 0], sizes = [8, 64], strides = [1, 1]} : vector<8x88xf32> to vector<8x64xf32>
      %73 = vector.extract_strided_slice %71 {offsets = [0, 0], sizes = [8, 64], strides = [1, 1]} : vector<8x72xf32> to vector<8x64xf32>
      %74 = arith.mulf %72, %73 : vector<8x64xf32>
      %cst_31 = arith.constant 2.400000e+00 : f32
      %75 = vector.broadcast %cst_31 : f32 to vector<8x64xf32>
      %76 = arith.subf %75, %72 : vector<8x64xf32>
      %77 = vector.extract_strided_slice %71 {offsets = [0, 8], sizes = [8, 64], strides = [1, 1]} : vector<8x72xf32> to vector<8x64xf32>
      %78 = arith.mulf %76, %77 : vector<8x64xf32>
      %79 = arith.addf %74, %78 : vector<8x64xf32>
      %cst_32 = arith.constant 0.555555582 : f32
      %80 = vector.broadcast %cst_32 : f32 to vector<8x64xf32>
      %81 = arith.mulf %79, %80 : vector<8x64xf32>
      %82 = arith.mulf %43, %43 : vector<8x64xf32>
      %cst_33 = arith.constant 0.000000e+00 : f32
      %83 = vector.broadcast %cst_33 : f32 to vector<8x64xf32>
      %84 = arith.subf %83, %82 : vector<8x64xf32>
      %85 = math.exp %84 : vector<8x64xf32>
      %86 = arith.addf %81, %85 : vector<8x64xf32>
      %87 = tpu.concatenate %33, %86 in 1 : vector<8x8xf32>, vector<8x64xf32> -> vector<8x72xf32>
      %88 = arith.truncf %87 : vector<8x72xf32> to vector<8x72xbf16>
      %c0_34 = arith.constant 0 : index
      %c0_35 = arith.constant 0 : index
      %89 = vector.load %arg9[%c0_34, %c0_35] : memref<8x72xbf16, #tpu.memory_space<vmem>>, vector<8x72xbf16>
      tpu.vector_store %arg9[%c0_34, %c0_35], %88 {strides = array<i32>} : memref<8x72xbf16, #tpu.memory_space<vmem>>, vector<8x72xbf16>,
    } else {
    }
    %c0 = arith.constant 0 : index
    %c0_1 = arith.constant 0 : index
    %3 = vector.load %arg9[%c0, %c0_1] : memref<8x72xbf16, #tpu.memory_space<vmem>>, vector<8x72xbf16>
    %c0_2 = arith.constant 0 : index
    %c0_3 = arith.constant 0 : index
    %4 = vector.load %arg7[%c0_2, %c0_3] : memref<72x128xbf16, #tpu.memory_space<vmem>>, vector<72x128xbf16>
    %cst = arith.constant dense<0.000000e+00> : vector<8x128xf32>
    %5 = tpu.matmul %3, %4, %cst {dimension_numbers = #tpu.dot_dimension_numbers<[1], [0], [0], [1], [0, 0, 1, 1], [], []>} : vector<8x72xbf16>, vector<72x128xbf16>, vector<8x128xf32> -> vector<8x128xf32>
    %c0_4 = arith.constant 0 : index
    %c0_5 = arith.constant 0 : index
    %6 = vector.load %arg8[%c0_4, %c0_5] : memref<8x128xf32, #tpu.memory_space<vmem>>, vector<8x128xf32>
    tpu.vector_store %arg8[%c0_4, %c0_5], %5 {strides = array<i32>} : memref<8x128xf32, #tpu.memory_space<vmem>>, vector<8x128xf32>,
    return
  }
  func.func @transform_0(%arg0: i32, %arg1: i32) -> (i32, i32) {
    %c0_i32 = arith.constant 0 : i32
    %c0_i32_0 = arith.constant 0 : i32
    return %arg0, %c0_i32 : i32, i32
  }
  func.func @transform_1(%arg0: i32, %arg1: i32) -> (i32, i32) {
    %c0_i32 = arith.constant 0 : i32
    %c0_i32_0 = arith.constant 0 : i32
    %c0_i32_1 = arith.constant 0 : i32
    return %c0_i32, %c0_i32_0 : i32, i32
  }
  func.func @transform_2(%arg0: i32, %arg1: i32) -> (i32, i32) {
    %c0_i32 = arith.constant 0 : i32
    %c0_i32_0 = arith.constant 0 : i32
    %c0_i32_1 = arith.constant 0 : i32
    return %c0_i32, %c0_i32_0 : i32, i32
  }
  func.func @transform_3(%arg0: i32, %arg1: i32) -> (i32, i32) {
    %c0_i32 = arith.constant 0 : i32
    %c0_i32_0 = arith.constant 0 : i32
    %c0_i32_1 = arith.constant 0 : i32
    return %c0_i32, %c0_i32_0 : i32, i32
  }
  func.func @transform_4(%arg0: i32, %arg1: i32) -> (i32, i32) {
    %c0_i32 = arith.constant 0 : i32
    %c0_i32_0 = arith.constant 0 : i32
    %c0_i32_1 = arith.constant 0 : i32
    return %c0_i32, %c0_i32_0 : i32, i32
  }
  func.func @transform_5(%arg0: i32, %arg1: i32) -> (i32, i32) {
    %c0_i32 = arith.constant 0 : i32
    %c0_i32_0 = arith.constant 0 : i32
    return %c0_i32, %arg1 : i32, i32
  }
  func.func @transform_6(%arg0: i32, %arg1: i32) -> (i32, i32) {
    %c0_i32 = arith.constant 0 : i32
    return %arg0, %arg1 : i32, i32
  }
}

</mosaic_0001>

<llo_original>
// kernel: tpu_custom_call.1
$region0: #{tpu_custom_call.1}
  #allocation0 [shape = 'u32[]', space=smem, size = 0x4, offset = 0x4, fixed_abs, tag = 'smem constant byte address 0x4 - core index']
  #allocation1 [shape = 'u32[144,128]{1,0:T(1,128)}', space=vmem, size = 0x12000, scoped, tag = 'internal scratch']
  #allocation2 [shape = 'bf16[8,72]{1,0:T(8,128)(2,1)}', space=vmem, size = 0x800, scoped, tag = 'scratch operand']
  %s0 = inlined_call_operand.vmem [shape: f32[16,8], index: 0, kind: input, shape index: {}]
  %s1 = inlined_call_operand.vmem [shape: f32[1,8], index: 1, kind: input, shape index: {}]
  %s2 = inlined_call_operand.vmem [shape: f32[1,8], index: 2, kind: input, shape index: {}]
  %s3 = inlined_call_operand.vmem [shape: f32[1,88], index: 3, kind: input, shape index: {}]
  %s4 = inlined_call_operand.vmem [shape: f32[1,64], index: 4, kind: input, shape index: {}]
  %s5 = inlined_call_operand.hbm [shape: bf16[72,128], index: 5, kind: input, shape index: {}]
  %s6 = inlined_call_operand.hbm [shape: f32[16,128], index: 6, kind: output, shape index: {}]
  %s7 = sld [smem:[#allocation0]]
  $region65: #{tpu_custom_call.1} parent=0
    _
  %s9 = ssub.s32 1, %s7
  %s10 = scalar_select 0, %s9, %s7
  $region1: #{tpu_custom_call.1} parent=0
    #allocation3 [shape = 'u8[18432]{0}', space=vmem, size = 0x4800, scoped, tag = 'input window, operand 5, single buffered']
    #allocation4 [shape = 's32[2]{0}', space=sflag, size = 0x8, scoped, tag = 'scoped memory for tpu_custom_call.1']
    #allocation5 [shape = 's32[2]{0}', space=sflag, size = 0x8, scoped, tag = 'scoped memory for tpu_custom_call.1']
    #allocation6 [shape = 'u8[8192]{0}', space=vmem, size = 0x2000, scoped, tag = 'output window, operand 0']
    %11 = vsyncpa [#allocation4], 0
    %12 = vsyncpa [#allocation5], 0
    %s13 = scalar_lea.sflag [#allocation5], 1
    %14 = vsyncpa %s13, 0
    loop: start=0, step=1, limit=4
    $region2: #{tpu_custom_call.1} parent=1 // loop_pre_header
      _
    $region3: #{tpu_custom_call.1} parent=1 // loop_header
      %s16 = sphi 0, %s20
      %p17 = scmp.ge.s32.totalorder %s16, 4
      %s23 = sphi 0, %s35
      %s24 = sphi 0, %s31
      %s25 = sphi 0, %s23
      %s26 = sphi 0, %s24
      %s27 = sphi 0, %s25
      %s28 = sphi 0, %s26
      %s38 = sphi 0, %s40
      %s41 = sphi 0, %s38
      %s42 = sphi 0, %s41
      %s58 = sphi 0, %s42
      %s62 = sphi 0, %s62
      %s64 = sphi 0, %s62
      %s65 = sphi 0, %s64
      %s79 = sphi 0, %s65
      %s83 = sphi 0, %s83
      %s85 = sphi 0, %s83
      %s86 = sphi 0, %s85
      %s100 = sphi 0, %s86
      %s104 = sphi 0, %s104
      %s106 = sphi 0, %s104
      %s107 = sphi 0, %s106
      %s121 = sphi 0, %s107
      %s125 = sphi 0, %s125
      %s127 = sphi 0, %s125
      %s128 = sphi 0, %s127
      %s142 = sphi 0, %s128
      %s148 = sphi 0, %s150
      %s151 = sphi 0, %s148
      %s152 = sphi 0, %s151
      %s168 = sphi 0, %s152
      %s176 = sphi 0, %s178
      %s179 = sphi 0, %s176
      %s180 = sphi 0, %s179
      %s196 = sphi 0, %s180
    $region4: #{tpu_custom_call.1} parent=1 // loop_header_branch
      %19 = sbr.rel (%p17) target = $region8
    $region5: #{tpu_custom_call.1} parent=1 // loop_body
      %s21 = ssub.s32 %s16, 1
      %s22 = ssub.s32 %s16, 2
      %s29 = sadd.s32 1, %s24
      %p30 = scmp.ge.s32.totalorder %s29, 1
      %s31 = scalar_select %p30, 0, %s29
      %s32 = sadd.s32 1, %s23
      %s33 = scalar_select %p30, %s32, %s23
      %p34 = scmp.ge.s32.totalorder %s33, 2
      %s35 = scalar_select %p34, 0, %s33
      %s36 = ssub.s32 %s23, %s35
      %p37 = scmp.eq.s32.totalorder %s36, 0
      %s39 = sadd.s32 %s38, 1
      %s40 = scalar_select %p37, %s38, %s39
      %p43 = pneg %p37
      %p44 = scmp.eq.s32.totalorder %s16, 1
      %p45 = por %p43, %p44
      %p46 = scmp.ne.s32.totalorder %s38, %s41
      %p47 = scmp.eq.s32.totalorder %s16, 0
      %p48 = por %p46, %p47
      %p49 = scmp.ne.s32.totalorder %s38, %s41
      %p50 = scmp.eq.s32.totalorder %s21, 1
      %p51 = por %p49, %p50
      %p52 = scmp.ne.s32.totalorder %s41, %s42
      %p53 = scmp.eq.s32.totalorder %s21, 0
      %p54 = por %p52, %p53
      %p55 = scmp.ne.s32.totalorder %s41, %s42
      %p56 = scmp.eq.s32.totalorder %s22, 1
      %p57 = por %p55, %p56
      %p59 = scmp.ne.s32.totalorder %s42, %s58
      %p60 = scmp.eq.s32.totalorder %s22, 0
      %p61 = por %p59, %p60
      %s63 = sadd.s32 %s62, 1
      %p66 = scmp.eq.s32.totalorder %s16, 1
      %p67 = scmp.ne.s32.totalorder %s62, %s64
      %p68 = scmp.eq.s32.totalorder %s16, 0
      %p69 = por %p67, %p68
      %p70 = scmp.ne.s32.totalorder %s62, %s64
      %p71 = scmp.eq.s32.totalorder %s21, 1
      %p72 = por %p70, %p71
      %p73 = scmp.ne.s32.totalorder %s64, %s65
      %p74 = scmp.eq.s32.totalorder %s21, 0
      %p75 = por %p73, %p74
      %p76 = scmp.ne.s32.totalorder %s64, %s65
      %p77 = scmp.eq.s32.totalorder %s22, 1
      %p78 = por %p76, %p77
      %p80 = scmp.ne.s32.totalorder %s65, %s79
      %p81 = scmp.eq.s32.totalorder %s22, 0
      %p82 = por %p80, %p81
      %s84 = sadd.s32 %s83, 1
      %p87 = scmp.eq.s32.totalorder %s16, 1
      %p88 = scmp.ne.s32.totalorder %s83, %s85
      %p89 = scmp.eq.s32.totalorder %s16, 0
      %p90 = por %p88, %p89
      %p91 = scmp.ne.s32.totalorder %s83, %s85
      %p92 = scmp.eq.s32.totalorder %s21, 1
      %p93 = por %p91, %p92
      %p94 = scmp.ne.s32.totalorder %s85, %s86
      %p95 = scmp.eq.s32.totalorder %s21, 0
      %p96 = por %p94, %p95
      %p97 = scmp.ne.s32.totalorder %s85, %s86
      %p98 = scmp.eq.s32.totalorder %s22, 1
      %p99 = por %p97, %p98
      %p101 = scmp.ne.s32.totalorder %s86, %s100
      %p102 = scmp.eq.s32.totalorder %s22, 0
      %p103 = por %p101, %p102
      %s105 = sadd.s32 %s104, 1
      %p108 = scmp.eq.s32.totalorder %s16, 1
      %p109 = scmp.ne.s32.totalorder %s104, %s106
      %p110 = scmp.eq.s32.totalorder %s16, 0
      %p111 = por %p109, %p110
      %p112 = scmp.ne.s32.totalorder %s104, %s106
      %p113 = scmp.eq.s32.totalorder %s21, 1
      %p114 = por %p112, %p113
      %p115 = scmp.ne.s32.totalorder %s106, %s107
      %p116 = scmp.eq.s32.totalorder %s21, 0
      %p117 = por %p115, %p116
      %p118 = scmp.ne.s32.totalorder %s106, %s107
      %p119 = scmp.eq.s32.totalorder %s22, 1
      %p120 = por %p118, %p119
      %p122 = scmp.ne.s32.totalorder %s107, %s121
      %p123 = scmp.eq.s32.totalorder %s22, 0
      %p124 = por %p122, %p123
      %s126 = sadd.s32 %s125, 1
      %p129 = scmp.eq.s32.totalorder %s16, 1
      %p130 = scmp.ne.s32.totalorder %s125, %s127
      %p131 = scmp.eq.s32.totalorder %s16, 0
      %p132 = por %p130, %p131
      %p133 = scmp.ne.s32.totalorder %s125, %s127
      %p134 = scmp.eq.s32.totalorder %s21, 1
      %p135 = por %p133, %p134
      %p136 = scmp.ne.s32.totalorder %s127, %s128
      %p137 = scmp.eq.s32.totalorder %s21, 0
      %p138 = por %p136, %p137
      %p139 = scmp.ne.s32.totalorder %s127, %s128
      %p140 = scmp.eq.s32.totalorder %s22, 1
      %p141 = por %p139, %p140
      %p143 = scmp.ne.s32.totalorder %s128, %s142
      %p144 = scmp.eq.s32.totalorder %s22, 0
      %p145 = por %p143, %p144
      %s146 = ssub.s32 %s24, %s31
      %p147 = scmp.eq.s32.totalorder %s146, 0
      %s149 = sadd.s32 %s148, 1
      %s150 = scalar_select %p147, %s148, %s149
      %p153 = pneg %p147
      %p154 = scmp.eq.s32.totalorder %s16, 1
      %p155 = por %p153, %p154
      %p156 = scmp.ne.s32.totalorder %s148, %s151
      %p157 = scmp.eq.s32.totalorder %s16, 0
      %p158 = por %p156, %p157
      %p159 = scmp.ne.s32.totalorder %s148, %s151
      %p160 = scmp.eq.s32.totalorder %s21, 1
      %p161 = por %p159, %p160
      %p162 = scmp.ne.s32.totalorder %s151, %s152
      %p163 = scmp.eq.s32.totalorder %s21, 0
      %p164 = por %p162, %p163
      %p165 = scmp.ne.s32.totalorder %s151, %s152
      %p166 = scmp.eq.s32.totalorder %s22, 1
      %p167 = por %p165, %p166
      %p169 = scmp.ne.s32.totalorder %s152, %s168
      %p170 = scmp.eq.s32.totalorder %s22, 0
      %p171 = por %p169, %p170
      %s172 = ssub.s32 %s23, %s35
      %s173 = ssub.s32 %s24, %s31
      %s174 = sor.u32 %s172, %s173
      %p175 = scmp.eq.s32.totalorder %s174, 0
      %s177 = sadd.s32 %s176, 1
      %s178 = scalar_select %p175, %s176, %s177
      %p181 = pneg %p175
      %p182 = scmp.eq.s32.totalorder %s16, 1
      %p183 = por %p181, %p182
      %p184 = scmp.ne.s32.totalorder %s176, %s179
      %p185 = scmp.eq.s32.totalorder %s16, 0
      %p186 = por %p184, %p185
      %p187 = scmp.ne.s32.totalorder %s176, %s179
      %p188 = scmp.eq.s32.totalorder %s21, 1
      %p189 = por %p187, %p188
      %p190 = scmp.ne.s32.totalorder %s179, %s180
      %p191 = scmp.eq.s32.totalorder %s21, 0
      %p192 = por %p190, %p191
      %p193 = scmp.ne.s32.totalorder %s179, %s180
      %p194 = scmp.eq.s32.totalorder %s22, 1
      %p195 = por %p193, %p194
      %p197 = scmp.ne.s32.totalorder %s180, %s196
      %p198 = scmp.eq.s32.totalorder %s22, 0
      %p199 = por %p197, %p198
      %p200 = scmp.le.s32.totalorder 1, %s16
      %p201 = scmp.lt.s32.totalorder %s16, 3
      %p202 = pnand %p200, %p201
      %p203 = pneg %p202
      // Predicated region
      $region9: #{tpu_custom_call.1} parent=5 // pred_check
        _
      $region10: #{tpu_custom_call.1} parent=5 // pred_check_branch
        %205 = sbr.rel (%p202) target = $region12
      $region11: #{tpu_custom_call.1} parent=5 // pred_region
        %s206 = ssub.s32 %s16, 1
        // Predicated region
        $region13: #{tpu_custom_call.1} parent=11 // pred_check
          %p207 = pneg %p75
        $region14: #{tpu_custom_call.1} parent=11 // pred_check_branch
          %209 = sbr.rel (%p207) target = $region16
        $region15: #{tpu_custom_call.1} parent=11 // pred_region
          _
        $region16: #{tpu_custom_call.1} parent=11 // pred_fallthru
          _
        // Predicated region
        $region17: #{tpu_custom_call.1} parent=11 // pred_check
          %p210 = pneg %p96
        $region18: #{tpu_custom_call.1} parent=11 // pred_check_branch
          %212 = sbr.rel (%p210) target = $region20
        $region19: #{tpu_custom_call.1} parent=11 // pred_region
          _
        $region20: #{tpu_custom_call.1} parent=11 // pred_fallthru
          _
        // Predicated region
        $region21: #{tpu_custom_call.1} parent=11 // pred_check
          %p213 = pneg %p117
        $region22: #{tpu_custom_call.1} parent=11 // pred_check_branch
          %215 = sbr.rel (%p213) target = $region24
        $region23: #{tpu_custom_call.1} parent=11 // pred_region
          _
        $region24: #{tpu_custom_call.1} parent=11 // pred_fallthru
          _
        // Predicated region
        $region25: #{tpu_custom_call.1} parent=11 // pred_check
          %p216 = pneg %p138
        $region26: #{tpu_custom_call.1} parent=11 // pred_check_branch
          %218 = sbr.rel (%p216) target = $region28
        $region27: #{tpu_custom_call.1} parent=11 // pred_region
          _
        $region28: #{tpu_custom_call.1} parent=11 // pred_fallthru
          _
        // Predicated region
        $region29: #{tpu_custom_call.1} parent=11 // pred_check
          %p219 = pneg %p164
        $region30: #{tpu_custom_call.1} parent=11 // pred_check_branch
          %221 = sbr.rel (%p219) target = $region32
        $region31: #{tpu_custom_call.1} parent=11 // pred_region
          %s223 = ssub.s32 576, 576
          %224 = vsyncadd [#allocation4], %s223
          %s225 = smul.addr %s26, 64
          %s226 = scalar_lea.hbm %s5, %s225
          %s227 = sshll.u32 [#allocation3], 4
          %s228 = int_to_ptr.vmem [resolvable:$true] %s227
          %233 = dma.hbm_to_vmem [thread:$0]  %s226, 576, %s228, [#allocation4], 64, 64, 4
        $region32: #{tpu_custom_call.1} parent=11 // pred_fallthru
          _
      $region12: #{tpu_custom_call.1} parent=5 // pred_fallthru
        _
      %p234 = scmp.lt.s32.totalorder %s16, 2
      // Predicated region
      $region33: #{tpu_custom_call.1} parent=5 // pred_check
        %p235 = pneg %p234
      $region34: #{tpu_custom_call.1} parent=5 // pred_check_branch
        %237 = sbr.rel (%p235) target = $region36
      $region35: #{tpu_custom_call.1} parent=5 // pred_region
        // Predicated region
        $region37: #{tpu_custom_call.1} parent=35 // pred_check
          %p238 = pneg %p48
        $region38: #{tpu_custom_call.1} parent=35 // pred_check_branch
          %240 = sbr.rel (%p238) target = $region40
        $region39: #{tpu_custom_call.1} parent=35 // pred_region
          %p241 = scmp.lt.s32.totalorder %s23, 1
          %s242 = scalar_select %p241, %s23, 1
          %s243 = smul.addr %s242, 8
          %s244 = scalar_lea.vmem %s0, %s243
        $region40: #{tpu_custom_call.1} parent=35 // pred_fallthru
          _
      $region36: #{tpu_custom_call.1} parent=5 // pred_fallthru
        _
      %p245 = scmp.le.s32.totalorder 1, %s16
      %p246 = scmp.lt.s32.totalorder %s16, 3
      %p247 = pnand %p245, %p246
      %p248 = pneg %p247
      // Predicated region
      $region41: #{tpu_custom_call.1} parent=5 // pred_check
        _
      $region42: #{tpu_custom_call.1} parent=5 // pred_check_branch
        %250 = sbr.rel (%p247) target = $region44
      $region43: #{tpu_custom_call.1} parent=5 // pred_region
        %s251 = ssub.s32 %s16, 1
        // Predicated region
        $region45: #{tpu_custom_call.1} parent=43 // pred_check
          %p252 = pneg %p164
        $region46: #{tpu_custom_call.1} parent=43 // pred_check_branch
          %254 = sbr.rel (%p252) target = $region48
        $region47: #{tpu_custom_call.1} parent=43 // pred_region
          %255 = dma.done [#allocation4], 576
        $region48: #{tpu_custom_call.1} parent=43 // pred_fallthru
          _
        %p256 = scmp.lt.s32.totalorder %s25, 1
        %s257 = scalar_select %p256, %s25, 1
        %s258 = smul.addr %s257, 8
        %s259 = scalar_lea.vmem %s0, %s258
        %p260 = pneg %p54
        %p261 = pneg %p51
        %p262 = pneg %p75
        %p263 = pneg %p72
        %p264 = pneg %p96
        %p265 = pneg %p93
        %p266 = pneg %p117
        %p267 = pneg %p114
        %p268 = pneg %p138
        %p269 = pneg %p135
        %p270 = pneg %p164
        %p271 = pneg %p161
        %p272 = pneg %p192
        %p273 = pneg %p189
        %s274 = sand.u32 %s179, 1
        %s275 = scalar_lea.sflag [#allocation5], %s274
        %s276 = sand.u32 %s179, 1
        %s277 = smul.addr %s276, 8
        %s278 = scalar_lea.vmem [#allocation6], %s277
        %p279 = scmp.lt.s32.totalorder %s25, 1
        %s280 = scalar_select %p279, %s25, 1
        %s281 = smul.addr %s280, 8
        %s282 = scalar_lea.vmem %s0, %s281
        %p284 = scmp.eq.s32.totalorder %s26, 0
        // Predicated region
        $region49: #{tpu_custom_call.1} parent=43 // pred_check
          %p285 = pneg %p284
        $region50: #{tpu_custom_call.1} parent=43 // pred_check_branch
          %287 = sbr.rel (%p285) target = $region52
        $region51: #{tpu_custom_call.1} parent=43 // pred_region
          %v288 = vld [vmem:[%s282] sm:$0xff]
          %vm289 = vcmask 64512
          %v290 = vsel %vm289, %v288, 0.0
          %291 = vadd.xlane.f32.xlu0 %v290
          %v292 = vpop.xlane.xlu0 %291
          %v293 = vrcp.pop 8.0
          %v294 = vmul.f32 %v292, %v293
          %v295 = vsub.f32 %v288, %v294
          %v296 = vmul.f32 %v295, %v295
          %v297 = vsel %vm289, %v296, 0.0
          %298 = vadd.xlane.f32.xlu0 %v297
          %v299 = vpop.xlane.xlu0 %298
          %v300 = vmul.f32 %v299, %v293
          %v301 = vld [vmem:[%s1] sm:$0x1]
          %v302 = vadd.f32 %v300, 1e-05
          %v303 = vrsqrt.pop %v302
          %v305 = vlaneseq
          %v306 = vshrl.u32 %v305, 7
          %v307 = vsub.s32 0, %v306
          %v308 = vrot.slane %v301, %v307
          %v310 = vmul.f32 %v308, %v303
          %v311 = vmul.f32 %v295, %v310
          %v312 = vld [vmem:[%s2] sm:$0x1]
          %v314 = vlaneseq
          %v315 = vshrl.u32 %v314, 7
          %v316 = vsub.s32 0, %v315
          %v317 = vrot.slane %v312, %v316
          %v319 = vadd.f32 %v311, %v317
          %v320 = vmax.f32 %v319, 0.0
          %322 = vrot.lane.b32.xlu0 %v319, 8
          %v323 = vpop.permute.xlu0 %322
          %325 = vrot.lane.b32.xlu0 %v319, 16
          %v326 = vpop.permute.xlu0 %325
          %328 = vrot.lane.b32.xlu0 %v319, 24
          %v329 = vpop.permute.xlu0 %328
          %331 = vrot.lane.b32.xlu0 %v319, 32
          %v332 = vpop.permute.xlu0 %331
          %334 = vrot.lane.b32.xlu0 %v319, 40
          %v335 = vpop.permute.xlu0 %334
          %337 = vrot.lane.b32.xlu0 %v319, 48
          %v338 = vpop.permute.xlu0 %337
          %340 = vrot.lane.b32.xlu0 %v319, 56
          %v341 = vpop.permute.xlu0 %340
          %343 = vrot.lane.b32.xlu0 %v319, 64
          %v344 = vpop.permute.xlu0 %343
          %346 = vrot.lane.b32.xlu0 %v319, 72
          %v347 = vpop.permute.xlu0 %346
          %349 = vrot.lane.b32.xlu0 %v319, 80
          %v350 = vpop.permute.xlu0 %349
          %v352 = vsel %vm289, %v319, %v323
          %vm353 = vcmask 130048
          %v354 = vsel %vm353, %v352, %v326
          %vm355 = vcmask 195584
          %v356 = vsel %vm355, %v354, %v329
          %vm357 = vcmask 261120
          %v358 = vsel %vm357, %v356, %v332
          %vm359 = vcmask 326656
          %v360 = vsel %vm359, %v358, %v335
          %vm361 = vcmask 392192
          %v362 = vsel %vm361, %v360, %v338
          %vm363 = vcmask 457728
          %v364 = vsel %vm363, %v362, %v341
          %vm365 = vcmask 523264
          %v366 = vsel %vm365, %v364, %v344
          %vm367 = vcmask 588800
          %v368 = vsel %vm367, %v366, %v347
          %vm369 = vcmask 654336
          %v370 = vsel %vm369, %v368, %v350
          %v371 = vld [vmem:[%s3] sm:$0x1]
          %v373 = vlaneseq
          %v374 = vshrl.u32 %v373, 7
          %v375 = vsub.s32 0, %v374
          %v376 = vrot.slane %v371, %v375
          %v378 = vsub.f32 %v370, %v376
          %v379 = vmul.f32 %v370, 2.3333333
          %v380 = vld [vmem:[%s4] sm:$0x1]
          %v382 = vlaneseq
          %v383 = vshrl.u32 %v382, 7
          %v384 = vsub.s32 0, %v383
          %v385 = vrot.slane %v380, %v384
          %v387 = vsub.f32 %v379, %v385
          %vm388 = vcmp.ge.f32.partialorder %v378, 0.0
          %vm389 = vcmp.lt.f32.partialorder %v378, 0.6
          %vm390 = vmand %vm388, %vm389
          %v391 = vsel %vm390, 1.0, 0.0
          %v392 = vmul.f32 %v378, %v391
          %v393 = vsub.f32 1.2, %v378
          %395 = vrot.lane.b32.xlu0 %v391, 120
          %v396 = vpop.permute.xlu0 %395
          %v398 = vmul.f32 %v393, %v396
          %v399 = vadd.f32 %v392, %v398
          %v400 = vmul.f32 %v399, 1.6666666
          %v401 = vmul.f32 %v378, %v400
          %v402 = vsub.f32 1.8, %v378
          %404 = vrot.lane.b32.xlu0 %v400, 120
          %v405 = vpop.permute.xlu0 %404
          %v407 = vmul.f32 %v402, %v405
          %v408 = vadd.f32 %v401, %v407
          %v409 = vmul.f32 %v408, 0.8333333
          %v410 = vmul.f32 %v378, %v409
          %v411 = vsub.f32 2.4, %v378
          %413 = vrot.lane.b32.xlu0 %v409, 120
          %v414 = vpop.permute.xlu0 %413
          %v416 = vmul.f32 %v411, %v414
          %v417 = vadd.f32 %v410, %v416
          %v418 = vmul.f32 %v417, 0.5555556
          %v419 = vmul.f32 %v387, %v387
          %v420 = vsub.f32 0.0, %v419
          %v421 = vmul.f32 %v420, 1.442695
          %v422 = vpow.pop %v421
          %v423 = vadd.f32 %v418, %v422
          %425 = vrot.lane.b32.xlu0 %v423, 8
          %v426 = vpop.permute.xlu0 %425
          %v428 = vsel %vm289, %v320, %v426
          %v429 = vpack.c.bf16 %v428, %v428
          %vm430 = vcmask 584704
          %431 = vst.msk [vmem:[#allocation2] sm:$0xf] %vm430, %v429
        $region52: #{tpu_custom_call.1} parent=43 // pred_fallthru
          _
        %v432 = vld [vmem:[#allocation2] sm:$0xf]
        %v433 = vld [vmem:[#allocation3] sm:$0xf]
        %v434 = vld [vmem:[#allocation3 + $0x4] sm:$0xf]
        %v435 = vld [vmem:[#allocation3 + $0x8] sm:$0xf]
        %v436 = vld [vmem:[#allocation3 + $0xc] sm:$0xf]
        %v437 = vld [vmem:[#allocation3 + $0x10] sm:$0xf]
        %v438 = vld [vmem:[#allocation3 + $0x14] sm:$0xf]
        %v439 = vld [vmem:[#allocation3 + $0x18] sm:$0xf]
        %v440 = vld [vmem:[#allocation3 + $0x1c] sm:$0xf]
        %v441 = vld [vmem:[#allocation3 + $0x20] sm:$0xf]
        %v451 = vunpack.c.l.b16 %v433
        %v452 = vunpack.c.l.b16 %v434
        %v453 = vunpack.c.l.b16 %v435
        %v454 = vunpack.c.l.b16 %v436
        %v455 = vunpack.c.l.b16 %v437
        %v456 = vunpack.c.l.b16 %v438
        %v457 = vunpack.c.l.b16 %v439
        %v458 = vunpack.c.l.b16 %v440
        %v459 = vunpack.c.l.b16 %v441
        %v460 = vpack.c.b16 %v452, %v451
        %v461 = vpack.c.b16 %v454, %v453
        %v462 = vpack.c.b16 %v456, %v455
        %v463 = vpack.c.b16 %v458, %v457
        %v464 = vpack.c.b16 %v459, %v459
        %vm469 = vcmask 588800
        %v471 = vsel %vm469, %v432, 0
        %vm473 = vcmask 1043456
        %v475 = vsel %vm473, %v464, 0
        %477 = vmatprep.subr.bf16.mxu0 0
        %478 = vmatpush1.bf16.msra.mxu0 0
        %479 = vmatprep.subr.bf16.mxu0 0
        %480 = vmatpush1.bf16.msra.mxu0 0
        %481 = vmatprep.subr.bf16.mxu0 0
        %482 = vmatpush1.bf16.msra.mxu0 0
        %483 = vmatprep.subr.bf16.mxu0 0
        %484 = vmatpush1.bf16.msra.mxu0 %v475
        %485 = vmatprep.subr.bf16.mxu0 0
        %486 = vmatpush1.bf16.msra.mxu0 %v463
        %487 = vmatprep.subr.bf16.mxu0 0
        %488 = vmatpush1.bf16.msra.mxu0 %v462
        %489 = vmatprep.subr.bf16.mxu0 0
        %490 = vmatpush1.bf16.msra.mxu0 %v461
        %491 = vmatprep.subr.bf16.mxu0 0
        %492 = vmatpush1.bf16.msra.mxu0 %v460
        %493 = vmatprep.subr.bf16.mxu0 0
        %494 = vmatpush2.bf16.msra.mxu0 0
        %495 = vmatprep.subr.bf16.mxu0 0
        %496 = vmatpush2.bf16.msra.mxu0 0
        %497 = vmatprep.subr.bf16.mxu0 0
        %498 = vmatpush2.bf16.msra.mxu0 0
        %499 = vmatprep.subr.bf16.mxu0 0
        %500 = vmatpush2.bf16.msra.mxu0 0
        %501 = vmatprep.subr.bf16.mxu0 0
        %502 = vmatpush2.bf16.msra.mxu0 0
        %503 = vmatprep.subr.bf16.mxu0 0
        %504 = vmatpush2.bf16.msra.mxu0 0
        %505 = vmatprep.subr.bf16.mxu0 0
        %506 = vmatpush2.bf16.msra.mxu0 0
        %507 = vmatprep.subr.bf16.mxu0 0
        %508 = vmatpush2.bf16.msra.mxu0 0
        %509 = vmatprep.mubr.bf16.mxu0 0
        %510 = vmatmul.mubr.bf16.gmra.mxu0 %v471
        %v511 = vpop.f32.mrf.mxu0
        %v512 = vadd.f32 0.0, %v511
        %v513 = vpop.f32.mrf.mxu0
        %v514 = vpop.f32.mrf.mxu0
        %v515 = vpop.f32.mrf.mxu0
        %516 = vdwg.mxu0
        %517 = vst [vmem:[%s278] sm:$0xff] %v512
        %s518 = sand.u32 %s179, 1
        %s519 = scalar_lea.sflag [#allocation5], %s518
        %s520 = sand.u32 %s179, 1
        %s521 = smul.addr %s520, 8
        %s522 = scalar_lea.vmem [#allocation6], %s521
        // Predicated region
        $region53: #{tpu_custom_call.1} parent=43 // pred_check
          %p523 = pneg %p189
        $region54: #{tpu_custom_call.1} parent=43 // pred_check_branch
          %525 = sbr.rel (%p523) target = $region56
        $region55: #{tpu_custom_call.1} parent=43 // pred_region
          %s527 = ssub.s32 128, 128
          %528 = vsyncadd %s519, %s527
          %s529 = sadd.s32 %s26, %s25
          %s530 = smul.addr %s529, 128
          %s531 = scalar_lea.hbm %s6, %s530
          %s533 = sshll.u32 %s522, 4
          %s534 = int_to_ptr.vmem [resolvable:$true] %s533
          %536 = dma.vmem_to_hbm [thread:$0]  %s534, 128, %s531, %s519
        $region56: #{tpu_custom_call.1} parent=43 // pred_fallthru
          _
      $region44: #{tpu_custom_call.1} parent=5 // pred_fallthru
        _
      %p537 = scmp.le.s32.totalorder 2, %s16
      // Predicated region
      $region57: #{tpu_custom_call.1} parent=5 // pred_check
        %p538 = pneg %p537
      $region58: #{tpu_custom_call.1} parent=5 // pred_check_branch
        %540 = sbr.rel (%p538) target = $region60
      $region59: #{tpu_custom_call.1} parent=5 // pred_region
        %s541 = ssub.s32 %s16, 2
        // Predicated region
        $region61: #{tpu_custom_call.1} parent=59 // pred_check
          %p542 = pneg %p195
        $region62: #{tpu_custom_call.1} parent=59 // pred_check_branch
          %544 = sbr.rel (%p542) target = $region64
        $region63: #{tpu_custom_call.1} parent=59 // pred_region
          %s545 = sand.u32 %s180, 1
          %s546 = scalar_lea.sflag [#allocation5], %s545
          %s547 = sand.u32 %s180, 1
          %s548 = smul.addr %s547, 8
          %s549 = scalar_lea.vmem [#allocation6], %s548
          %550 = dma.done %s546, 128
        $region64: #{tpu_custom_call.1} parent=59 // pred_fallthru
          _
      $region60: #{tpu_custom_call.1} parent=5 // pred_fallthru
        _
    $region6: #{tpu_custom_call.1} parent=1 // loop_footer
      %s20 = sadd.s32 1, %s16
    $region7: #{tpu_custom_call.1} parent=1 // loop_footer_branch
      %15 = sbr.rel target = $region3
    $region8: #{tpu_custom_call.1} parent=1 // loop_exit
      _
    %551 = vsyncpa [#allocation4], 1
    %s552 = scalar_lea.sflag [#allocation4], 1
    %553 = vsyncpa %s552, 1
    %554 = vsyncpa [#allocation5], 1
    %s555 = scalar_lea.sflag [#allocation5], 1
    %556 = vsyncpa %s555, 1

</llo_original>
